<compile_context>
chip_gen: v7x
topology: tpu7x:2x2x1
jax: 0.10.0
libtpu: 0.0.40
codegen_flags: <defaults>
</compile_context>

<pallas_src>
from typing import NamedTuple

import jax
import jax.numpy as jnp
from jax.experimental import pallas as pl
from jax.experimental.pallas import tpu as pltpu


# ---------------------------------------------------------------------------
# Kernel
# ---------------------------------------------------------------------------
def mlp_kernel(x_ref, w1_ref, b1_ref, w2_ref, b2_ref, o_ref, acc_ref):
    h_idx = pl.program_id(1)

    @pl.when(h_idx == 0)
    def _init():
        acc_ref[...] = jnp.zeros_like(acc_ref)

    # Layer 1 on this hidden block: (TB, D_in_p) @ (D_in_p, TH) -> f32 on the MXU.
    h = jnp.dot(x_ref[...], w1_ref[...], preferred_element_type=jnp.float32)
    h = jax.nn.sigmoid(h + b1_ref[...])                         # f32 bias + EUP sigmoid

    # Layer 2 partial product, accumulated in f32.
    acc_ref[...] += jnp.dot(h.astype(jnp.bfloat16), w2_ref[...],
                            preferred_element_type=jnp.float32)

    @pl.when(h_idx == pl.num_programs(1) - 1)
    def _finalize():
        o_ref[...] = jax.nn.sigmoid(acc_ref[...] + b2_ref[...]).astype(o_ref.dtype)


# ---------------------------------------------------------------------------
# Helpers
# ---------------------------------------------------------------------------
def _round_up(x, m):
    return ((x + m - 1) // m) * m


def _tpu_vmem_capacity_bytes():
    try:
        return int(pltpu.get_tpu_info().vmem_capacity_bytes)
    except Exception:
        return 64 * 1024 * 1024  # conservative fallback (v7x per-TC VMEM)


def _choose_tile_b(B, max_tile_b):
    """8-aligned batch tile: big enough to amortize per-step overhead, small enough to
    (a) give >= 2 grid steps when the batch allows (v7x megacore) and (b) avoid gross
    batch-padding waste when B is just above a tile size."""
    b8 = _round_up(B, 8)
    if b8 <= 256:
        return b8                                   # small batch: single step
    cap = min(max_tile_b, max(256, _round_up(b8 // 2, 8)))
    candidates = [t for t in (2048, 1024, 512, 256, 128, 64) if t <= cap]
    for t in candidates:                            # largest tile with <1/8 padded rows
        padded = _round_up(b8, t)
        if (padded - b8) * 8 < padded:
            return t
    return min(candidates, key=lambda t: _round_up(b8, t) - b8)


# ---------------------------------------------------------------------------
# One-time weight preparation (hoisted out of the per-call path)
# ---------------------------------------------------------------------------
class MLPParams(NamedTuple):
    w1_t: jax.Array     # (D_in_p, H_p)  bf16, transposed + zero-padded
    b1_p: jax.Array     # (1, H_p)       f32, zero-padded
    w2_t: jax.Array     # (H_p, D_out_p) bf16, transposed + zero-padded
    b2_p: jax.Array     # (1, D_out_p)   f32, zero-padded
    d_in: int
    d_out: int
    tile_h: int


def prepare_mlp_params(w1, b1, w2, b2, *, vmem_cap_bytes=None):
    """Pad (lane-dense, multiples of 128), transpose and cast the PyTorch-layout
    weights once.  Also decides the hidden-dim tile so the weight blocks respect the
    current chip's VMEM budget."""
    H, D_in = w1.shape
    D_out = w2.shape[0]
    d_in_p = _round_up(D_in, 128)
    d_out_p = _round_up(D_out, 128)

    if vmem_cap_bytes is None:
        vmem_cap_bytes = _tpu_vmem_capacity_bytes()
    # Budget for weight blocks: ~1/3 of VMEM (rest: x/out tiles, accumulator, compiler scratch).
    weight_budget = vmem_cap_bytes // 3

    h_p_full = _round_up(H, 128)
    full_w_bytes = 2 * h_p_full * (d_in_p + d_out_p)            # bf16 W1^T + W2^T
    if full_w_bytes <= weight_budget:
        tile_h = h_p_full                                       # fully resident, single-buffered
    else:
        # Hidden-dim tiling: two buffers of both weight blocks must fit the budget.
        tile_h = max(128, (weight_budget // (4 * (d_in_p + d_out_p))) // 128 * 128)
    h_p = _round_up(H, tile_h)

    w1_t = jnp.zeros((d_in_p, h_p), jnp.bfloat16).at[:D_in, :H].set(w1.T.astype(jnp.bfloat16))
    w2_t = jnp.zeros((h_p, d_out_p), jnp.bfloat16).at[:H, :D_out].set(w2.T.astype(jnp.bfloat16))
    b1_p = jnp.zeros((1, h_p), jnp.float32).at[0, :H].set(b1.astype(jnp.float32))
    b2_p = jnp.zeros((1, d_out_p), jnp.float32).at[0, :D_out].set(b2.astype(jnp.float32))
    return MLPParams(w1_t, b1_p, w2_t, b2_p, D_in, D_out, tile_h)


# ---------------------------------------------------------------------------
# Forward
# ---------------------------------------------------------------------------
def mlp_forward(x, params: MLPParams, *, max_tile_b=1024, out_dtype=jnp.float32):
    """x: (B, D_in) f32.  Returns sigmoid(sigmoid(x @ W1.T + b1) @ W2.T + b2)."""
    B, D_in = x.shape
    assert D_in == params.d_in, (D_in, params.d_in)
    d_in_p, h_p = params.w1_t.shape
    d_out_p = params.w2_t.shape[1]
    tile_h = params.tile_h
    nh = h_p // tile_h

    vmem_cap = _tpu_vmem_capacity_bytes()
    vmem_ceiling = int(vmem_cap * 0.8)              # leave headroom for compiler scratch

    out_bytes = jnp.dtype(out_dtype).itemsize
    nbuf_w = 1 if nh == 1 else 2                    # single-buffer resident weights
    weight_vmem = (nbuf_w * (d_in_p * tile_h + tile_h * d_out_p) * 2   # W1^T, W2^T bf16
                   + nbuf_w * 8 * tile_h * 4                           # b1 (8-sublane padded)
                   + 8 * d_out_p * 4)                                  # b2 (single-buffered)

    def tiles_vmem(tb):
        return (2 * tb * d_in_p * 2                 # x tile, bf16, double-buffered
                + 2 * tb * d_out_p * out_bytes      # out tile, double-buffered
                + tb * d_out_p * 4)                 # f32 accumulator scratch

    tile_b = _choose_tile_b(B, max_tile_b)
    while tile_b > 64 and weight_vmem + tiles_vmem(tile_b) > vmem_ceiling:
        tile_b = max(64, tile_b // 2)

    b_p = _round_up(_round_up(B, 8), tile_b)
    grid = (b_p // tile_b, nh)

    est_vmem = weight_vmem + tiles_vmem(tile_b)
    vmem_limit = int(min(max(2 * est_vmem, 32 * 1024 * 1024), vmem_ceiling))

    # Per-call input padding only (weights were prepared once, outside this call).
    x_p = jnp.zeros((b_p, d_in_p), jnp.bfloat16).at[:B, :D_in].set(x.astype(jnp.bfloat16))

    cost = pl.CostEstimate(
        flops=2 * b_p * h_p * (d_in_p + d_out_p),
        transcendentals=b_p * (h_p + d_out_p),
        bytes_accessed=(b_p * d_in_p * 2 + 2 * h_p * (d_in_p + d_out_p)
                        + h_p * 4 + d_out_p * 4 + b_p * d_out_p * out_bytes),
    )

    # Blocks with a constant index map are single-buffered; blocks that move along the
    # hidden axis keep the default double-buffering for prefetch overlap.
    w_mode = pl.Buffered(1) if nh == 1 else None

    out_p = pl.pallas_call(
        mlp_kernel,
        out_shape=jax.ShapeDtypeStruct((b_p, d_out_p), out_dtype),
        grid_spec=pltpu.PrefetchScalarGridSpec(
            num_scalar_prefetch=0,
            grid=grid,
            in_specs=[
                pl.BlockSpec((tile_b, d_in_p), lambda i, h: (i, 0)),                          # x tile
                pl.BlockSpec((d_in_p, tile_h), lambda i, h: (0, h), pipeline_mode=w_mode),    # W1^T
                pl.BlockSpec((1, tile_h),      lambda i, h: (0, h), pipeline_mode=w_mode),    # b1
                pl.BlockSpec((tile_h, d_out_p), lambda i, h: (h, 0), pipeline_mode=w_mode),   # W2^T
                pl.BlockSpec((1, d_out_p),     lambda i, h: (0, 0), pipeline_mode=pl.Buffered(1)),  # b2
            ],
            out_specs=pl.BlockSpec((tile_b, d_out_p), lambda i, h: (i, 0)),
            scratch_shapes=[pltpu.VMEM((tile_b, d_out_p), jnp.float32)],
        ),
        compiler_params=pltpu.CompilerParams(
            dimension_semantics=("parallel", "arbitrary"),
            vmem_limit_bytes=vmem_limit,
        ),
        cost_estimate=cost,
    )(x_p, params.w1_t, params.b1_p, params.w2_t, params.b2_p)

    # Strip padding back to the logical shape.
    return out_p[:B, :params.d_out]


# ---------------------------------------------------------------------------
# Torch-style init + self-check
# ---------------------------------------------------------------------------
def init_linear_params(key, in_dim, out_dim):
    # Mimic torch.nn.Linear default init: U(-1/sqrt(in_dim), 1/sqrt(in_dim)).
    k_w, k_b = jax.random.split(key)
    bound = 1.0 / (in_dim ** 0.5)
    w = jax.random.uniform(k_w, (out_dim, in_dim), jnp.float32, -bound, bound)
    b = jax.random.uniform(k_b, (out_dim,), jnp.float32, -bound, bound)
    return w, b


if __name__ == "__main__":
    # Small toy shapes consistent with the MLP module.
    batch, input_dim, hidden_dim, output_dim = 32, 16, 32, 8

    key = jax.random.PRNGKey(0)
    k_x, k_l1, k_l2 = jax.random.split(key, 3)

    x = jax.random.normal(k_x, (batch, input_dim), jnp.float32)
    w1, b1 = init_linear_params(k_l1, input_dim, hidden_dim)   # (H, D_in), (H,)
    w2, b2 = init_linear_params(k_l2, hidden_dim, output_dim)  # (D_out, H), (D_out,)

    # One-time weight prep (hoisted out of the per-call path), then forward.
    params = prepare_mlp_params(w1, b1, w2, b2)
    out = mlp_forward(x, params)
    out = jax.block_until_ready(out)

    # Reference check (plain f32 JAX). bf16 operands => loose-ish tolerance.
    # TODO(synk): if bit-closeness to torch f32 is required, keep f32 operands
    # (at ~3-4x MXU cost) instead of bf16.
    ref_h = jax.nn.sigmoid(x @ w1.T + b1)
    ref_y = jax.nn.sigmoid(ref_h @ w2.T + b2)
    assert out.shape == (batch, output_dim)
    assert jnp.allclose(out, ref_y, atol=2e-2, rtol=2e-2), float(jnp.max(jnp.abs(out - ref_y)))

    print("KERNEL_OK")
</pallas_src>

<mosaic_0001>
module attributes {stable_mosaic.version = 11 : i64} {
  func.func @mlp_kernel(%arg0: i32, %arg1: i32, %arg2: memref<32x128xbf16, #tpu.memory_space<vmem>>, %arg3: memref<128x128xbf16, #tpu.memory_space<vmem>>, %arg4: memref<1x128xf32, #tpu.memory_space<vmem>>, %arg5: memref<128x128xbf16, #tpu.memory_space<vmem>>, %arg6: memref<1x128xf32, #tpu.memory_space<vmem>>, %arg7: memref<32x128xf32, #tpu.memory_space<vmem>>, %arg8: memref<32x128xf32, #tpu.memory_space<vmem>>) attributes {dimension_semantics = [#tpu.dimension_semantics<parallel>, #tpu.dimension_semantics<arbitrary>], iteration_bounds = array<i64: 1, 1>, scalar_prefetch = 0 : i64, scratch_operands = 1 : i64, tpu.core_type = #tpu.core_type<tc>, window_params = [{transform_indices = @transform_0, window_bounds = array<i64: 32, 128>}, {pipeline_mode = #tpu.pipeline_mode<synchronous>, transform_indices = @transform_1, window_bounds = array<i64: 128, 128>}, {pipeline_mode = #tpu.pipeline_mode<synchronous>, transform_indices = @transform_2, window_bounds = array<i64: 1, 128>}, {pipeline_mode = #tpu.pipeline_mode<synchronous>, transform_indices = @transform_3, window_bounds = array<i64: 128, 128>}, {pipeline_mode = #tpu.pipeline_mode<synchronous>, transform_indices = @transform_4, window_bounds = array<i64: 1, 128>}, {transform_indices = @transform_5, window_bounds = array<i64: 32, 128>}]} {
    %c0_i32 = arith.constant 0 : i32
    %0 = arith.cmpi eq, %arg1, %c0_i32 : i32
    %1 = arith.extui %0 : i1 to i32
    %c0_i32_0 = arith.constant 0 : i32
    %2 = arith.cmpi ne, %1, %c0_i32_0 : i32
    scf.if %2 {
      %cst_16 = arith.constant 0.000000e+00 : f32
      %23 = vector.broadcast %cst_16 : f32 to vector<32x128xf32>
      %c0_17 = arith.constant 0 : index
      %c0_18 = arith.constant 0 : index
      %24 = vector.load %arg8[%c0_17, %c0_18] : memref<32x128xf32, #tpu.memory_space<vmem>>, vector<32x128xf32>
      tpu.vector_store %arg8[%c0_17, %c0_18], %23 {strides = array<i32>} : memref<32x128xf32, #tpu.memory_space<vmem>>, vector<32x128xf32>,
    } else {
    }
    %c0 = arith.constant 0 : index
    %c0_1 = arith.constant 0 : index
    %3 = vector.load %arg2[%c0, %c0_1] : memref<32x128xbf16, #tpu.memory_space<vmem>>, vector<32x128xbf16>
    %c0_2 = arith.constant 0 : index
    %c0_3 = arith.constant 0 : index
    %4 = vector.load %arg3[%c0_2, %c0_3] : memref<128x128xbf16, #tpu.memory_space<vmem>>, vector<128x128xbf16>
    %cst = arith.constant dense<0.000000e+00> : vector<32x128xf32>
    %5 = tpu.matmul %3, %4, %cst {dimension_numbers = #tpu.dot_dimension_numbers<[1], [0], [0], [1], [0, 0, 1, 1], [], []>} : vector<32x128xbf16>, vector<128x128xbf16>, vector<32x128xf32> -> vector<32x128xf32>
    %c0_4 = arith.constant 0 : index
    %c0_5 = arith.constant 0 : index
    %6 = vector.load %arg4[%c0_4, %c0_5] : memref<1x128xf32, #tpu.memory_space<vmem>>, vector<1x128xf32>
    %7 = vector.broadcast %6 : vector<1x128xf32> to vector<32x128xf32>
    %8 = arith.addf %5, %7 : vector<32x128xf32>
    %9 = arith.negf %8 : vector<32x128xf32>
    %10 = math.exp %9 : vector<32x128xf32>
    %cst_6 = arith.constant 1.000000e+00 : f32
    %11 = vector.broadcast %cst_6 : f32 to vector<32x128xf32>
    %12 = arith.addf %11, %10 : vector<32x128xf32>
    %13 = arith.divf %11, %12 : vector<32x128xf32>
    %c0_7 = arith.constant 0 : index
    %c0_8 = arith.constant 0 : index
    %14 = vector.load %arg8[%c0_7, %c0_8] : memref<32x128xf32, #tpu.memory_space<vmem>>, vector<32x128xf32>
    %15 = arith.truncf %13 : vector<32x128xf32> to vector<32x128xbf16>
    %c0_9 = arith.constant 0 : index
    %c0_10 = arith.constant 0 : index
    %16 = vector.load %arg5[%c0_9, %c0_10] : memref<128x128xbf16, #tpu.memory_space<vmem>>, vector<128x128xbf16>
    %cst_11 = arith.constant dense<0.000000e+00> : vector<32x128xf32>
    %17 = tpu.matmul %15, %16, %cst_11 {dimension_numbers = #tpu.dot_dimension_numbers<[1], [0], [0], [1], [0, 0, 1, 1], [], []>} : vector<32x128xbf16>, vector<128x128xbf16>, vector<32x128xf32> -> vector<32x128xf32>
    %18 = arith.addf %14, %17 : vector<32x128xf32>
    %c0_12 = arith.constant 0 : index
    %c0_13 = arith.constant 0 : index
    %19 = vector.load %arg8[%c0_12, %c0_13] : memref<32x128xf32, #tpu.memory_space<vmem>>, vector<32x128xf32>
    tpu.vector_store %arg8[%c0_12, %c0_13], %18 {strides = array<i32>} : memref<32x128xf32, #tpu.memory_space<vmem>>, vector<32x128xf32>,
    %c0_i32_14 = arith.constant 0 : i32
    %20 = arith.cmpi eq, %arg1, %c0_i32_14 : i32
    %21 = arith.extui %20 : i1 to i32
    %c0_i32_15 = arith.constant 0 : i32
    %22 = arith.cmpi ne, %21, %c0_i32_15 : i32
    scf.if %22 {
      %c0_16 = arith.constant 0 : index
      %c0_17 = arith.constant 0 : index
      %23 = vector.load %arg8[%c0_16, %c0_17] : memref<32x128xf32, #tpu.memory_space<vmem>>, vector<32x128xf32>
      %c0_18 = arith.constant 0 : index
      %c0_19 = arith.constant 0 : index
      %24 = vector.load %arg6[%c0_18, %c0_19] : memref<1x128xf32, #tpu.memory_space<vmem>>, vector<1x128xf32>
      %25 = vector.broadcast %24 : vector<1x128xf32> to vector<32x128xf32>
      %26 = arith.addf %23, %25 : vector<32x128xf32>
      %27 = arith.negf %26 : vector<32x128xf32>
      %28 = math.exp %27 : vector<32x128xf32>
      %cst_20 = arith.constant 1.000000e+00 : f32
      %29 = vector.broadcast %cst_20 : f32 to vector<32x128xf32>
      %30 = arith.addf %29, %28 : vector<32x128xf32>
      %31 = arith.divf %29, %30 : vector<32x128xf32>
      %c0_21 = arith.constant 0 : index
      %c0_22 = arith.constant 0 : index
      %32 = vector.load %arg7[%c0_21, %c0_22] : memref<32x128xf32, #tpu.memory_space<vmem>>, vector<32x128xf32>
      tpu.vector_store %arg7[%c0_21, %c0_22], %31 {strides = array<i32>} : memref<32x128xf32, #tpu.memory_space<vmem>>, vector<32x128xf32>,
    } else {
    }
    return
  }
  func.func @transform_0(%arg0: i32, %arg1: i32) -> (i32, i32) {
    %c0_i32 = arith.constant 0 : i32
    %c0_i32_0 = arith.constant 0 : i32
    return %arg0, %c0_i32 : i32, i32
  }
  func.func @transform_1(%arg0: i32, %arg1: i32) -> (i32, i32) {
    %c0_i32 = arith.constant 0 : i32
    %c0_i32_0 = arith.constant 0 : i32
    return %c0_i32, %arg1 : i32, i32
  }
  func.func @transform_2(%arg0: i32, %arg1: i32) -> (i32, i32) {
    %c0_i32 = arith.constant 0 : i32
    %c0_i32_0 = arith.constant 0 : i32
    return %c0_i32, %arg1 : i32, i32
  }
  func.func @transform_3(%arg0: i32, %arg1: i32) -> (i32, i32) {
    %c0_i32 = arith.constant 0 : i32
    %c0_i32_0 = arith.constant 0 : i32
    return %arg1, %c0_i32 : i32, i32
  }
  func.func @transform_4(%arg0: i32, %arg1: i32) -> (i32, i32) {
    %c0_i32 = arith.constant 0 : i32
    %c0_i32_0 = arith.constant 0 : i32
    %c0_i32_1 = arith.constant 0 : i32
    return %c0_i32, %c0_i32_0 : i32, i32
  }
  func.func @transform_5(%arg0: i32, %arg1: i32) -> (i32, i32) {
    %c0_i32 = arith.constant 0 : i32
    %c0_i32_0 = arith.constant 0 : i32
    return %arg0, %c0_i32 : i32, i32
  }
}

</mosaic_0001>

<llo_original>
// kernel: tpu_custom_call.1
$region0: #{tpu_custom_call.1}
  #allocation0 [shape = 'u32[]', space=smem, size = 0x4, offset = 0x4, fixed_abs, tag = 'smem constant byte address 0x4 - core index']
  #allocation1 [shape = 'u32[144,128]{1,0:T(1,128)}', space=vmem, size = 0x12000, scoped, tag = 'internal scratch']
  #allocation2 [shape = 'f32[32,128]{1,0:T(8,128)}', space=vmem, size = 0x4000, scoped, tag = 'scratch operand']
  %s0 = inlined_call_operand.hbm [shape: bf16[32,128], index: 0, kind: input, shape index: {}]
  %s1 = inlined_call_operand.hbm [shape: bf16[128,128], index: 1, kind: input, shape index: {}]
  %s2 = inlined_call_operand.vmem [shape: f32[1,128], index: 2, kind: input, shape index: {}]
  %s3 = inlined_call_operand.hbm [shape: bf16[128,128], index: 3, kind: input, shape index: {}]
  %s4 = inlined_call_operand.vmem [shape: f32[1,128], index: 4, kind: input, shape index: {}]
  %s5 = inlined_call_operand.hbm [shape: f32[32,128], index: 5, kind: output, shape index: {}]
  %s6 = sld [smem:[#allocation0]]
  $region50: #{tpu_custom_call.1} parent=0
    _
  %s8 = ssub.s32 1, %s6
  %s9 = scalar_select 0, %s8, %s6
  $region1: #{tpu_custom_call.1} parent=0
    #allocation3 [shape = 'u8[8192]{0}', space=vmem, size = 0x2000, scoped, tag = 'input window, operand 0, single buffered']
    #allocation4 [shape = 's32[1]{0}', space=sflag, size = 0x4, scoped, tag = 'scoped memory for tpu_custom_call.1']
    #allocation5 [shape = 's32[1]{0}', space=sflag, size = 0x4, scoped, tag = 'scoped memory for tpu_custom_call.1']
    #allocation6 [shape = 'u8[32768]{0}', space=vmem, size = 0x8000, scoped, tag = 'input window, operand 1, single buffered']
    #allocation7 [shape = 's32[1]{0}', space=sflag, size = 0x4, scoped, tag = 'scoped memory for tpu_custom_call.1']
    #allocation8 [shape = 'u8[32768]{0}', space=vmem, size = 0x8000, scoped, tag = 'input window, operand 3, single buffered']
    #allocation9 [shape = 'u8[16384]{0}', space=vmem, size = 0x4000, scoped, tag = 'output window, operand 0, single buffered']
    %10 = vsyncpa [#allocation4], 0
    %11 = vsyncpa [#allocation7], 0
    %12 = vsyncpa [#allocation5], 0
    // Predicated region
    $region2: #{tpu_custom_call.1} parent=1 // pred_check
      _
    $region3: #{tpu_custom_call.1} parent=1 // pred_check_branch
      %14 = sbr.rel (0) target = $region5
    $region4: #{tpu_custom_call.1} parent=1 // pred_region
      %s16 = ssub.s32 256, 256
      %17 = vsyncadd [#allocation4], %s16
      %s18 = sshll.u32 [#allocation3], 4
      %s19 = int_to_ptr.vmem [resolvable:$true] %s18
      %24 = dma.hbm_to_vmem [thread:$0]  %s0, 256, %s19, [#allocation4], 64, 64, 4
    $region5: #{tpu_custom_call.1} parent=1 // pred_fallthru
      _
    // Predicated region
    $region6: #{tpu_custom_call.1} parent=1 // pred_check
      _
    $region7: #{tpu_custom_call.1} parent=1 // pred_check_branch
      %26 = sbr.rel (0) target = $region9
    $region8: #{tpu_custom_call.1} parent=1 // pred_region
      %s28 = ssub.s32 1024, 1024
      %29 = vsyncadd [#allocation7], %s28
      %s30 = sshll.u32 [#allocation6], 4
      %s31 = int_to_ptr.vmem [resolvable:$true] %s30
      %36 = dma.hbm_to_vmem [thread:$0]  %s1, 1024, %s31, [#allocation7], 64, 64, 4
    $region9: #{tpu_custom_call.1} parent=1 // pred_fallthru
      _
    // Predicated region
    $region10: #{tpu_custom_call.1} parent=1 // pred_check
      _
    $region11: #{tpu_custom_call.1} parent=1 // pred_check_branch
      %38 = sbr.rel (0) target = $region13
    $region12: #{tpu_custom_call.1} parent=1 // pred_region
      _
    $region13: #{tpu_custom_call.1} parent=1 // pred_fallthru
      _
    // Predicated region
    $region14: #{tpu_custom_call.1} parent=1 // pred_check
      _
    $region15: #{tpu_custom_call.1} parent=1 // pred_check_branch
      %40 = sbr.rel (0) target = $region17
    $region16: #{tpu_custom_call.1} parent=1 // pred_region
      %s42 = ssub.s32 1024, 1024
      %43 = vsyncadd [#allocation7], %s42
      %s44 = sshll.u32 [#allocation8], 4
      %s45 = int_to_ptr.vmem [resolvable:$true] %s44
      %50 = dma.hbm_to_vmem [thread:$0]  %s3, 1024, %s45, [#allocation7], 64, 64, 4
    $region17: #{tpu_custom_call.1} parent=1 // pred_fallthru
      _
    // Predicated region
    $region18: #{tpu_custom_call.1} parent=1 // pred_check
      _
    $region19: #{tpu_custom_call.1} parent=1 // pred_check_branch
      %52 = sbr.rel (0) target = $region21
    $region20: #{tpu_custom_call.1} parent=1 // pred_region
      _
    $region21: #{tpu_custom_call.1} parent=1 // pred_fallthru
      _
    // Predicated region
    $region22: #{tpu_custom_call.1} parent=1 // pred_check
      _
    $region23: #{tpu_custom_call.1} parent=1 // pred_check_branch
      %54 = sbr.rel (0) target = $region25
    $region24: #{tpu_custom_call.1} parent=1 // pred_region
      %55 = dma.done [#allocation4], 256
    $region25: #{tpu_custom_call.1} parent=1 // pred_fallthru
      _
    // Predicated region
    $region26: #{tpu_custom_call.1} parent=1 // pred_check
      _
    $region27: #{tpu_custom_call.1} parent=1 // pred_check_branch
      %57 = sbr.rel (0) target = $region29
    $region28: #{tpu_custom_call.1} parent=1 // pred_region
      %58 = dma.done [#allocation7], 1024
    $region29: #{tpu_custom_call.1} parent=1 // pred_fallthru
      _
    // Predicated region
    $region30: #{tpu_custom_call.1} parent=1 // pred_check
      _
    $region31: #{tpu_custom_call.1} parent=1 // pred_check_branch
      %60 = sbr.rel (0) target = $region33
    $region32: #{tpu_custom_call.1} parent=1 // pred_region
      %61 = dma.done [#allocation7], 1024
    $region33: #{tpu_custom_call.1} parent=1 // pred_fallthru
      _
    %p63 = scmp.eq.s32.totalorder 0, 0
    // Predicated region
    $region34: #{tpu_custom_call.1} parent=1 // pred_check
      %p64 = pneg %p63
    $region35: #{tpu_custom_call.1} parent=1 // pred_check_branch
      %66 = sbr.rel (%p64) target = $region37
    $region36: #{tpu_custom_call.1} parent=1 // pred_region
      %67 = vst [vmem:[#allocation2] sm:$0xff] 0.0
      %68 = vst [vmem:[#allocation2 + $0x8] sm:$0xff] 0.0
      %69 = vst [vmem:[#allocation2 + $0x10] sm:$0xff] 0.0
      %70 = vst [vmem:[#allocation2 + $0x18] sm:$0xff] 0.0
    $region37: #{tpu_custom_call.1} parent=1 // pred_fallthru
      _
    %v71 = vld [vmem:[#allocation3] sm:$0xf]
    %v72 = vld [vmem:[#allocation3 + $0x4] sm:$0xf]
    %v73 = vld [vmem:[#allocation3 + $0x8] sm:$0xf]
    %v74 = vld [vmem:[#allocation3 + $0xc] sm:$0xf]
    %v75 = vld [vmem:[#allocation6] sm:$0xf]
    %v76 = vld [vmem:[#allocation6 + $0x4] sm:$0xf]
    %v77 = vld [vmem:[#allocation6 + $0x8] sm:$0xf]
    %v78 = vld [vmem:[#allocation6 + $0xc] sm:$0xf]
    %v79 = vld [vmem:[#allocation6 + $0x10] sm:$0xf]
    %v80 = vld [vmem:[#allocation6 + $0x14] sm:$0xf]
    %v81 = vld [vmem:[#allocation6 + $0x18] sm:$0xf]
    %v82 = vld [vmem:[#allocation6 + $0x1c] sm:$0xf]
    %v83 = vld [vmem:[#allocation6 + $0x20] sm:$0xf]
    %v84 = vld [vmem:[#allocation6 + $0x24] sm:$0xf]
    %v85 = vld [vmem:[#allocation6 + $0x28] sm:$0xf]
    %v86 = vld [vmem:[#allocation6 + $0x2c] sm:$0xf]
    %v87 = vld [vmem:[#allocation6 + $0x30] sm:$0xf]
    %v88 = vld [vmem:[#allocation6 + $0x34] sm:$0xf]
    %v89 = vld [vmem:[#allocation6 + $0x38] sm:$0xf]
    %v90 = vld [vmem:[#allocation6 + $0x3c] sm:$0xf]
    %v91 = vld [vmem:[%s2] sm:$0x1]
    %v93 = vlaneseq
    %v94 = vshrl.u32 %v93, 7
    %v95 = vsub.s32 0, %v94
    %v96 = vrot.slane %v91, %v95
    %v102 = vunpack.c.l.b16 %v71
    %v103 = vunpack.c.l.b16 %v72
    %v104 = vunpack.c.l.b16 %v73
    %v105 = vunpack.c.l.b16 %v74
    %v106 = vpack.c.b16 %v103, %v102
    %v107 = vpack.c.b16 %v105, %v104
    %v126 = vunpack.c.l.b16 %v75
    %v127 = vunpack.c.l.b16 %v76
    %v128 = vunpack.c.l.b16 %v77
    %v129 = vunpack.c.l.b16 %v78
    %v130 = vunpack.c.l.b16 %v79
    %v131 = vunpack.c.l.b16 %v80
    %v132 = vunpack.c.l.b16 %v81
    %v133 = vunpack.c.l.b16 %v82
    %v134 = vunpack.c.l.b16 %v83
    %v135 = vunpack.c.l.b16 %v84
    %v136 = vunpack.c.l.b16 %v85
    %v137 = vunpack.c.l.b16 %v86
    %v138 = vunpack.c.l.b16 %v87
    %v139 = vunpack.c.l.b16 %v88
    %v140 = vunpack.c.l.b16 %v89
    %v141 = vunpack.c.l.b16 %v90
    %v142 = vpack.c.b16 %v127, %v126
    %v143 = vpack.c.b16 %v129, %v128
    %v144 = vpack.c.b16 %v131, %v130
    %v145 = vpack.c.b16 %v133, %v132
    %v146 = vpack.c.b16 %v135, %v134
    %v147 = vpack.c.b16 %v137, %v136
    %v148 = vpack.c.b16 %v139, %v138
    %v149 = vpack.c.b16 %v141, %v140
    %158 = vmatprep.subr.bf16.mxu0 0
    %159 = vmatpush1.bf16.msra.mxu0 %v142
    %160 = vmatprep.subr.bf16.mxu0 0
    %161 = vmatpush1.bf16.msra.mxu0 %v143
    %162 = vmatprep.subr.bf16.mxu0 0
    %163 = vmatpush1.bf16.msra.mxu0 %v144
    %164 = vmatprep.subr.bf16.mxu0 0
    %165 = vmatpush1.bf16.msra.mxu0 %v145
    %166 = vmatprep.subr.bf16.mxu0 0
    %167 = vmatpush1.bf16.msra.mxu0 %v146
    %168 = vmatprep.subr.bf16.mxu0 0
    %169 = vmatpush1.bf16.msra.mxu0 %v147
    %170 = vmatprep.subr.bf16.mxu0 0
    %171 = vmatpush1.bf16.msra.mxu0 %v148
    %172 = vmatprep.subr.bf16.mxu0 0
    %173 = vmatpush1.bf16.msra.mxu0 %v149
    %174 = vmatprep.subr.bf16.mxu0 0
    %175 = vmatpush1.bf16.msra.mxu0 0
    %176 = vmatprep.subr.bf16.mxu0 0
    %177 = vmatpush1.bf16.msra.mxu0 0
    %178 = vmatprep.subr.bf16.mxu0 0
    %179 = vmatpush1.bf16.msra.mxu0 0
    %180 = vmatprep.subr.bf16.mxu0 0
    %181 = vmatpush1.bf16.msra.mxu0 0
    %182 = vmatprep.subr.bf16.mxu0 0
    %183 = vmatpush1.bf16.msra.mxu0 0
    %184 = vmatprep.subr.bf16.mxu0 0
    %185 = vmatpush1.bf16.msra.mxu0 0
    %186 = vmatprep.subr.bf16.mxu0 0
    %187 = vmatpush1.bf16.msra.mxu0 0
    %188 = vmatprep.subr.bf16.mxu0 0
    %189 = vmatpush1.bf16.msra.mxu0 0
    %190 = vmatprep.mubr.bf16.mxu0 0
    %191 = vmatmul.mubr.bf16.gmra.mrb[0].mxu0 %v106
    %v192 = vpop.f32.mrb[0].mxu0
    %v193 = vadd.f32 %v96, %v192
    %v194 = vpop.f32.mrb[0].mxu0
    %v195 = vpop.f32.mrb[0].mxu0
    %v196 = vadd.f32 %v96, %v195
    %v197 = vpop.f32.mrb[0].mxu0
    %198 = vmatprep.mubr.bf16.mxu0 0
    %199 = vmatmul.mubr.bf16.gmra.mrb[0].mxu0 %v107
    %v200 = vpop.f32.mrb[0].mxu0
    %v201 = vadd.f32 %v96, %v200
    %v202 = vpop.f32.mrb[0].mxu0
    %v203 = vpop.f32.mrb[0].mxu0
    %v204 = vadd.f32 %v96, %v203
    %v205 = vpop.f32.mrb[0].mxu0
    %206 = vdwg.mxu0
    %v207 = vxor.u32 %v193, 2147483648
    %v208 = vxor.u32 %v196, 2147483648
    %v209 = vxor.u32 %v201, 2147483648
    %v210 = vxor.u32 %v204, 2147483648
    %v211 = vmul.f32 %v207, 1.442695
    %v212 = vpow.pop %v211
    %v213 = vmul.f32 %v208, 1.442695
    %v214 = vpow.pop %v213
    %v215 = vmul.f32 %v209, 1.442695
    %v216 = vpow.pop %v215
    %v217 = vmul.f32 %v210, 1.442695
    %v218 = vpow.pop %v217
    %v219 = vadd.f32 %v212, 1.0
    %v220 = vadd.f32 %v214, 1.0
    %v221 = vadd.f32 %v216, 1.0
    %v222 = vadd.f32 %v218, 1.0
    %v223 = vrcp.pop %v219
    %v224 = vmul.f32 1.0, %v223
    %v225 = vrcp.pop %v220
    %v226 = vmul.f32 1.0, %v225
    %v227 = vrcp.pop %v221
    %v228 = vmul.f32 1.0, %v227
    %v229 = vrcp.pop %v222
    %v230 = vmul.f32 1.0, %v229
    %v231 = vld [vmem:[#allocation2] sm:$0xff]
    %v232 = vld [vmem:[#allocation2 + $0x8] sm:$0xff]
    %v233 = vld [vmem:[#allocation2 + $0x10] sm:$0xff]
    %v234 = vld [vmem:[#allocation2 + $0x18] sm:$0xff]
    %v235 = vpack.c.bf16 %v226, %v224
    %v236 = vpack.c.bf16 %v230, %v228
    %v237 = vld [vmem:[#allocation8] sm:$0xf]
    %v238 = vld [vmem:[#allocation8 + $0x4] sm:$0xf]
    %v239 = vld [vmem:[#allocation8 + $0x8] sm:$0xf]
    %v240 = vld [vmem:[#allocation8 + $0xc] sm:$0xf]
    %v241 = vld [vmem:[#allocation8 + $0x10] sm:$0xf]
    %v242 = vld [vmem:[#allocation8 + $0x14] sm:$0xf]
    %v243 = vld [vmem:[#allocation8 + $0x18] sm:$0xf]
    %v244 = vld [vmem:[#allocation8 + $0x1c] sm:$0xf]
    %v245 = vld [vmem:[#allocation8 + $0x20] sm:$0xf]
    %v246 = vld [vmem:[#allocation8 + $0x24] sm:$0xf]
    %v247 = vld [vmem:[#allocation8 + $0x28] sm:$0xf]
    %v248 = vld [vmem:[#allocation8 + $0x2c] sm:$0xf]
    %v249 = vld [vmem:[#allocation8 + $0x30] sm:$0xf]
    %v250 = vld [vmem:[#allocation8 + $0x34] sm:$0xf]
    %v251 = vld [vmem:[#allocation8 + $0x38] sm:$0xf]
    %v252 = vld [vmem:[#allocation8 + $0x3c] sm:$0xf]
    %v269 = vunpack.c.l.b16 %v237
    %v270 = vunpack.c.l.b16 %v238
    %v271 = vunpack.c.l.b16 %v239
    %v272 = vunpack.c.l.b16 %v240
    %v273 = vunpack.c.l.b16 %v241
    %v274 = vunpack.c.l.b16 %v242
    %v275 = vunpack.c.l.b16 %v243
    %v276 = vunpack.c.l.b16 %v244
    %v277 = vunpack.c.l.b16 %v245
    %v278 = vunpack.c.l.b16 %v246
    %v279 = vunpack.c.l.b16 %v247
    %v280 = vunpack.c.l.b16 %v248
    %v281 = vunpack.c.l.b16 %v249
    %v282 = vunpack.c.l.b16 %v250
    %v283 = vunpack.c.l.b16 %v251
    %v284 = vunpack.c.l.b16 %v252
    %v285 = vpack.c.b16 %v270, %v269
    %v286 = vpack.c.b16 %v272, %v271
    %v287 = vpack.c.b16 %v274, %v273
    %v288 = vpack.c.b16 %v276, %v275
    %v289 = vpack.c.b16 %v278, %v277
    %v290 = vpack.c.b16 %v280, %v279
    %v291 = vpack.c.b16 %v282, %v281
    %v292 = vpack.c.b16 %v284, %v283
    %301 = vmatprep.subr.bf16.mxu0 0
    %302 = vmatpush1.bf16.msra.mxu0 %v285
    %303 = vmatprep.subr.bf16.mxu0 0
    %304 = vmatpush1.bf16.msra.mxu0 %v286
    %305 = vmatprep.subr.bf16.mxu0 0
    %306 = vmatpush1.bf16.msra.mxu0 %v287
    %307 = vmatprep.subr.bf16.mxu0 0
    %308 = vmatpush1.bf16.msra.mxu0 %v288
    %309 = vmatprep.subr.bf16.mxu0 0
    %310 = vmatpush1.bf16.msra.mxu0 %v289
    %311 = vmatprep.subr.bf16.mxu0 0
    %312 = vmatpush1.bf16.msra.mxu0 %v290
    %313 = vmatprep.subr.bf16.mxu0 0
    %314 = vmatpush1.bf16.msra.mxu0 %v291
    %315 = vmatprep.subr.bf16.mxu0 0
    %316 = vmatpush1.bf16.msra.mxu0 %v292
    %317 = vmatprep.subr.bf16.mxu0 0
    %318 = vmatpush1.bf16.msra.mxu0 0
    %319 = vmatprep.subr.bf16.mxu0 0
    %320 = vmatpush1.bf16.msra.mxu0 0
    %321 = vmatprep.subr.bf16.mxu0 0
    %322 = vmatpush1.bf16.msra.mxu0 0
    %323 = vmatprep.subr.bf16.mxu0 0
    %324 = vmatpush1.bf16.msra.mxu0 0
    %325 = vmatprep.subr.bf16.mxu0 0
    %326 = vmatpush1.bf16.msra.mxu0 0
    %327 = vmatprep.subr.bf16.mxu0 0
    %328 = vmatpush1.bf16.msra.mxu0 0
    %329 = vmatprep.subr.bf16.mxu0 0
    %330 = vmatpush1.bf16.msra.mxu0 0
    %331 = vmatprep.subr.bf16.mxu0 0
    %332 = vmatpush1.bf16.msra.mxu0 0
    %333 = vmatprep.mubr.bf16.mxu0 0
    %334 = vmatmul.mubr.bf16.gmra.mrb[0].mxu0 %v235
    %v335 = vpop.f32.mrb[0].mxu0
    %v336 = vadd.f32 0.0, %v335
    %v337 = vpop.f32.mrb[0].mxu0
    %v338 = vpop.f32.mrb[0].mxu0
    %v339 = vadd.f32 0.0, %v338
    %v340 = vpop.f32.mrb[0].mxu0
    %341 = vmatprep.mubr.bf16.mxu0 0
    %342 = vmatmul.mubr.bf16.gmra.mrb[0].mxu0 %v236
    %v343 = vpop.f32.mrb[0].mxu0
    %v344 = vadd.f32 0.0, %v343
    %v345 = vpop.f32.mrb[0].mxu0
    %v346 = vpop.f32.mrb[0].mxu0
    %v347 = vadd.f32 0.0, %v346
    %v348 = vpop.f32.mrb[0].mxu0
    %349 = vdwg.mxu0
    %v350 = vadd.f32 %v231, %v336
    %v351 = vadd.f32 %v232, %v339
    %v352 = vadd.f32 %v233, %v344
    %v353 = vadd.f32 %v234, %v347
    %354 = vst [vmem:[#allocation2] sm:$0xff] %v350
    %355 = vst [vmem:[#allocation2 + $0x8] sm:$0xff] %v351
    %356 = vst [vmem:[#allocation2 + $0x10] sm:$0xff] %v352
    %357 = vst [vmem:[#allocation2 + $0x18] sm:$0xff] %v353
    // Predicated region
    $region38: #{tpu_custom_call.1} parent=1 // pred_check
      %p358 = pneg %p63
    $region39: #{tpu_custom_call.1} parent=1 // pred_check_branch
      %360 = sbr.rel (%p358) target = $region41
    $region40: #{tpu_custom_call.1} parent=1 // pred_region
      %v361 = vld [vmem:[#allocation2] sm:$0xff]
      %v362 = vld [vmem:[#allocation2 + $0x8] sm:$0xff]
      %v363 = vld [vmem:[#allocation2 + $0x10] sm:$0xff]
      %v364 = vld [vmem:[#allocation2 + $0x18] sm:$0xff]
      %v365 = vld [vmem:[%s4] sm:$0x1]
      %v367 = vlaneseq
      %v368 = vshrl.u32 %v367, 7
      %v369 = vsub.s32 0, %v368
      %v370 = vrot.slane %v365, %v369
      %v372 = vadd.f32 %v361, %v370
      %v373 = vadd.f32 %v362, %v370
      %v374 = vadd.f32 %v363, %v370
      %v375 = vadd.f32 %v364, %v370
      %v376 = vxor.u32 %v372, 2147483648
      %v377 = vxor.u32 %v373, 2147483648
      %v378 = vxor.u32 %v374, 2147483648
      %v379 = vxor.u32 %v375, 2147483648
      %v380 = vmul.f32 %v376, 1.442695
      %v381 = vpow.pop %v380
      %v382 = vmul.f32 %v377, 1.442695
      %v383 = vpow.pop %v382
      %v384 = vmul.f32 %v378, 1.442695
      %v385 = vpow.pop %v384
      %v386 = vmul.f32 %v379, 1.442695
      %v387 = vpow.pop %v386
      %v388 = vadd.f32 %v381, 1.0
      %v389 = vadd.f32 %v383, 1.0
      %v390 = vadd.f32 %v385, 1.0
      %v391 = vadd.f32 %v387, 1.0
      %v392 = vrcp.pop %v388
      %v393 = vmul.f32 1.0, %v392
      %v394 = vrcp.pop %v389
      %v395 = vmul.f32 1.0, %v394
      %v396 = vrcp.pop %v390
      %v397 = vmul.f32 1.0, %v396
      %v398 = vrcp.pop %v391
      %v399 = vmul.f32 1.0, %v398
      %400 = vst [vmem:[#allocation9] sm:$0xff] %v393
      %401 = vst [vmem:[#allocation9 + $0x8] sm:$0xff] %v395
      %402 = vst [vmem:[#allocation9 + $0x10] sm:$0xff] %v397
      %403 = vst [vmem:[#allocation9 + $0x18] sm:$0xff] %v399
    $region41: #{tpu_custom_call.1} parent=1 // pred_fallthru
      _
    // Predicated region
    $region42: #{tpu_custom_call.1} parent=1 // pred_check
      _
    $region43: #{tpu_custom_call.1} parent=1 // pred_check_branch
      %405 = sbr.rel (0) target = $region45
    $region44: #{tpu_custom_call.1} parent=1 // pred_region
      %s407 = ssub.s32 512, 512
      %408 = vsyncadd [#allocation5], %s407
      %s409 = sshll.u32 [#allocation9], 4
      %s410 = int_to_ptr.vmem [resolvable:$true] %s409
      %415 = dma.vmem_to_hbm [thread:$0]  %s410, 512, %s5, [#allocation5], 128, 128, 8
    $region45: #{tpu_custom_call.1} parent=1 // pred_fallthru
      _
    // Predicated region
    $region46: #{tpu_custom_call.1} parent=1 // pred_check
      _
    $region47: #{tpu_custom_call.1} parent=1 // pred_check_branch
      %417 = sbr.rel (0) target = $region49
    $region48: #{tpu_custom_call.1} parent=1 // pred_region
      %418 = dma.done [#allocation5], 512
    $region49: #{tpu_custom_call.1} parent=1 // pred_fallthru
      _
    %419 = vsyncpa [#allocation4], 1
    %420 = vsyncpa [#allocation7], 1
    %421 = vsyncpa [#allocation5], 1

</llo_original>
